<compile_context>
chip_gen: v7x
topology: tpu7x:2x2x1
jax: 0.10.0
libtpu: 0.0.40
codegen_flags: <defaults>
</compile_context>

<pallas_src>
import functools

import jax
import jax.numpy as jnp
from jax.experimental import pallas as pl
from jax.experimental.pallas import tpu as pltpu


LN_EPS = 1e-5  # torch.nn.LayerNorm default


def _round_up(x, m):
    return (x + m - 1) // m * m


def _vmem_capacity_bytes():
    try:
        return int(pltpu.get_tpu_info().vmem_capacity_bytes)
    except Exception:
        return 64 * 1024 * 1024  # conservative: v7x per-TC VMEM


def _incremental_residual_kernel(
    x_ref,       # (TILE_N, Wp)       f32 (full-precision input)
    wf_ref,      # (Wp, H_T + H_G)    fused [transform[0] | feature_gate[0]] weights
    bf_ref,      # (1, H_T + H_G)     fused biases, f32
    w2_ref,      # (H_T, Wp)          transform[3] weight
    b2_ref,      # (1, Wp)            f32
    wg2_ref,     # (H_G, Wp)          feature_gate[3] weight
    bg2_ref,     # (1, Wp)            f32
    gamma_ref,   # (1, Wp)            LayerNorm weight, f32 (zero in padded cols)
    beta_ref,    # (1, Wp)            LayerNorm bias,  f32 (zero in padded cols)
    mf_ref,      # (1, 1)             sigmoid(memory_strength), SMEM scalar
    o_ref,       # (TILE_N, Wp)       output dtype == input dtype
    *,
    h_split,     # static: H_T (lane-aligned split of the fused hidden slab)
    w_real,      # static: un-padded feature width W
    pad_cols,    # static: Wp - W
):
    x_f32 = x_ref[...].astype(jnp.float32)     # residual / LayerNorm path: full precision
    x_mm = x_f32.astype(wf_ref.dtype)          # MXU operand (bf16 in production)

    # Fused first layers: one MXU pass for Linear(W,2W) and Linear(W,W//2),
    # f32 accumulation, shared ReLU (both branches are Linear -> ReLU).
    hg = jnp.dot(x_mm, wf_ref[...], preferred_element_type=jnp.float32) + bf_ref[...]
    hg = jnp.maximum(hg, 0.0)
    h = hg[:, :h_split]     # (TILE_N, H_T)   transform hidden
    gh = hg[:, h_split:]    # (TILE_N, H_G)   gate hidden

    # transform: second Linear (dropouts are eval-mode identities)
    t = (
        jnp.dot(h.astype(w2_ref.dtype), w2_ref[...],
                preferred_element_type=jnp.float32)
        + b2_ref[...]
    )

    # feature_gate: second Linear -> Sigmoid
    gate = jax.nn.sigmoid(
        jnp.dot(gh.astype(wg2_ref.dtype), wg2_ref[...],
                preferred_element_type=jnp.float32)
        + bg2_ref[...]
    )

    mem = mf_ref[0, 0]  # sigmoid(memory_strength), precomputed scalar
    out = t * gate + x_f32 * (1.0 - gate) * mem

    # LayerNorm over the real (un-padded) W columns.  Padded columns of `out` are
    # exactly zero by construction (zero-padded x / weights / biases; gate*0 == 0),
    # so sums over Wp equal sums over W; only the centred-square sum needs the
    # pad correction.  NOTE: this invariant is load-bearing -- keep padding zero.
    inv_w = 1.0 / float(w_real)
    mu = jnp.sum(out, axis=-1, keepdims=True) * inv_w
    diff = out - mu
    sq = jnp.sum(diff * diff, axis=-1, keepdims=True)
    if pad_cols:
        sq = sq - float(pad_cols) * (mu * mu)
    var = sq * inv_w
    normed = diff * jax.lax.rsqrt(var + LN_EPS)
    o_ref[...] = (normed * gamma_ref[...] + beta_ref[...]).astype(o_ref.dtype)


def incremental_residual_block(x, params, *, matmul_dtype=jnp.bfloat16,
                               tile_n_target=512):
    """x: (B, S, W) float32.  Returns (B, S, W) in x.dtype."""
    B, S, W = x.shape
    N = B * S
    out_dtype = x.dtype

    # ---- static lane-dense layout constants ----
    Wp = _round_up(W, 128)                 # feature width on the lane axis
    H_T = _round_up(2 * W, 128)            # transform hidden width (>= 2W)
    H_G = _round_up(max(W // 2, 1), 128)   # gate hidden width (>= W//2)
    pad_cols = Wp - W

    mm_itemsize = jnp.dtype(matmul_dtype).itemsize
    out_itemsize = jnp.dtype(out_dtype).itemsize

    # ---- VMEM-budgeted row tiling ----
    weight_elems = Wp * (H_T + H_G) + (H_T + H_G) * Wp
    weight_bytes = weight_elems * mm_itemsize + (H_T + H_G + 6 * Wp) * 4
    per_row_bytes = (
        2 * Wp * 4                      # x tile, f32, double-buffered
        + 2 * Wp * out_itemsize         # out tile, double-buffered
        + (H_T + H_G + 6 * Wp) * 4      # f32 temporaries (hg, t, gate, out, diff, ...)
    )
    cap = _vmem_capacity_bytes()
    budget = int(cap * 0.60)            # leave headroom for compiler scratch
    max_rows = (budget - weight_bytes) // max(per_row_bytes, 1)
    max_tile = max(8, (max_rows // 8) * 8)
    tile_target = max(8, min(tile_n_target, max_tile))

    grid_n = max(1, -(-N // tile_target))
    if grid_n < 2 and _round_up(N, 8) >= 16:
        grid_n = 2                      # keep both v7x TensorCores busy
    tile_n = _round_up(-(-N // grid_n), 8)
    n_pad = tile_n * grid_n
    grid = (grid_n,)

    required = weight_bytes + tile_n * per_row_bytes + (2 << 20)
    vmem_limit = int(min(cap * 9 // 10,
                         max(required * 5 // 4, 32 * 1024 * 1024)))

    # ---- lane-dense, pre-transposed (in, out) parameters (zero-padded) ----
    # NOTE: zero padding is required for the LayerNorm pad-correction to be exact.
    def pad2(a, rows, cols):
        return jnp.pad(a, ((0, rows - a.shape[0]), (0, cols - a.shape[1])))

    w1p = pad2(params["w1"], Wp, H_T)
    wg1p = pad2(params["wg1"], Wp, H_G)
    wf = jnp.concatenate([w1p, wg1p], axis=1).astype(matmul_dtype)        # (Wp, H_T+H_G)
    bfu = jnp.concatenate(
        [pad2(params["b1"], 1, H_T), pad2(params["bg1"], 1, H_G)], axis=1
    ).astype(jnp.float32)                                                 # (1, H_T+H_G)
    w2 = pad2(params["w2"], H_T, Wp).astype(matmul_dtype)
    b2 = pad2(params["b2"], 1, Wp).astype(jnp.float32)
    wg2 = pad2(params["wg2"], H_G, Wp).astype(matmul_dtype)
    bg2 = pad2(params["bg2"], 1, Wp).astype(jnp.float32)
    gamma = pad2(params["gamma"], 1, Wp).astype(jnp.float32)
    beta = pad2(params["beta"], 1, Wp).astype(jnp.float32)
    mf = params["memory_factor"].astype(jnp.float32).reshape(1, 1)

    # x stays in its input dtype (f32); no wrapper cast pass.  Pad only if needed.
    x2d = x.reshape(N, W)
    needs_pad = (n_pad != N) or (pad_cols != 0)
    if needs_pad:
        x2d = jnp.pad(x2d, ((0, n_pad - N), (0, pad_cols)))

    # ---- specs: rows tiled (double-buffered), weights VMEM-resident, single-buffered ----
    row_spec = pl.BlockSpec((tile_n, Wp), lambda i: (i, 0))

    def const_spec(shape):
        # Constant block index => single buffer is enough; halves resident weight VMEM.
        return pl.BlockSpec(shape, lambda i: (0, 0), pipeline_mode=pl.Buffered(1))

    in_specs = [
        row_spec,                       # x
        const_spec((Wp, H_T + H_G)),    # wf
        const_spec((1, H_T + H_G)),     # bf
        const_spec((H_T, Wp)),          # w2
        const_spec((1, Wp)),            # b2
        const_spec((H_G, Wp)),          # wg2
        const_spec((1, Wp)),            # bg2
        const_spec((1, Wp)),            # gamma
        const_spec((1, Wp)),            # beta
        pl.BlockSpec(memory_space=pltpu.MemorySpace.SMEM),  # memory_factor scalar
    ]

    # ---- scheduling hint for XLA ----
    flops = 2 * n_pad * Wp * (H_T + H_G) + 2 * n_pad * (H_T + H_G) * Wp
    transcendentals = n_pad * Wp + n_pad                      # sigmoid + rsqrt
    bytes_accessed = int(
        n_pad * Wp * (4 + out_itemsize)                       # f32 x in + out
        + weight_elems * mm_itemsize
        + (H_T + H_G + 6 * Wp + 1) * 4                        # biases/affine/scalar
    )
    cost = pl.CostEstimate(
        flops=int(flops), transcendentals=int(transcendentals),
        bytes_accessed=bytes_accessed,
    )

    kernel = functools.partial(
        _incremental_residual_kernel,
        h_split=H_T, w_real=W, pad_cols=pad_cols,
    )

    out2d = pl.pallas_call(
        kernel,
        out_shape=jax.ShapeDtypeStruct((n_pad, Wp), out_dtype),
        grid=grid,
        in_specs=in_specs,
        out_specs=row_spec,
        compiler_params=pltpu.CompilerParams(
            dimension_semantics=("parallel",),
            vmem_limit_bytes=vmem_limit,
        ),
        cost_estimate=cost,
    )(x2d, wf, bfu, w2, b2, wg2, bg2, gamma, beta, mf)

    if needs_pad:
        out2d = out2d[:N, :W]
    return out2d.reshape(B, S, W)


def init_params(key, width):
    """Deterministic init mirroring PyTorch nn.Linear defaults (U(-1/sqrt(fan_in), ...)).

    Weights are stored transposed as (in, out); biases as (1, out)."""
    def linear(k, fan_in, fan_out):
        kw, kb = jax.random.split(k)
        bound = 1.0 / jnp.sqrt(fan_in)
        w = jax.random.uniform(kw, (fan_in, fan_out), jnp.float32, -bound, bound)
        b = jax.random.uniform(kb, (1, fan_out), jnp.float32, -bound, bound)
        return w, b

    k1, k2, k3, k4 = jax.random.split(key, 4)
    w1, b1 = linear(k1, width, 2 * width)          # transform[0]
    w2, b2 = linear(k2, 2 * width, width)          # transform[3]
    wg1, bg1 = linear(k3, width, width // 2)       # feature_gate[0]
    wg2, bg2 = linear(k4, width // 2, width)       # feature_gate[3]

    memory_strength = jnp.float32(0.8)             # nn.Parameter(torch.tensor(0.8))
    # sigmoid applied exactly once here; the kernel uses this value as-is.
    memory_factor = jax.nn.sigmoid(memory_strength).reshape(1, 1)

    return {
        "w1": w1, "b1": b1,
        "w2": w2, "b2": b2,
        "wg1": wg1, "bg1": bg1,
        "wg2": wg2, "bg2": bg2,
        "gamma": jnp.ones((1, width), jnp.float32),   # LayerNorm weight
        "beta": jnp.zeros((1, width), jnp.float32),   # LayerNorm bias
        "memory_factor": memory_factor,
    }


def reference(x, params):
    """Pure-JAX reference of the same forward (preserve_features=True, eval mode)."""
    B, S, W = x.shape
    x2d = x.reshape(B * S, W)
    h = jnp.maximum(x2d @ params["w1"] + params["b1"], 0.0)
    t = h @ params["w2"] + params["b2"]
    gh = jnp.maximum(x2d @ params["wg1"] + params["bg1"], 0.0)
    gate = jax.nn.sigmoid(gh @ params["wg2"] + params["bg2"])
    mem = params["memory_factor"][0, 0]
    out = t * gate + x2d * (1.0 - gate) * mem
    mu = jnp.mean(out, axis=-1, keepdims=True)
    var = jnp.mean((out - mu) ** 2, axis=-1, keepdims=True)
    normed = (out - mu) / jnp.sqrt(var + LN_EPS)
    return (normed * params["gamma"] + params["beta"]).reshape(B, S, W)


if __name__ == "__main__":
    key = jax.random.PRNGKey(0)
    k_x, k_p = jax.random.split(key)

    B, S, W = 2, 8, 32
    x = jax.random.normal(k_x, (B, S, W), jnp.float32)
    params = init_params(k_p, W)

    ref = reference(x, params)

    # f32 parity path (tight tolerance against the pure-JAX reference).
    run_f32 = jax.jit(functools.partial(incremental_residual_block,
                                        matmul_dtype=jnp.float32))
    out_f32 = jax.block_until_ready(run_f32(x, params))
    assert out_f32.shape == (B, S, W)
    assert jnp.allclose(out_f32, ref, atol=2e-4, rtol=2e-4), \
        "f32 path mismatch vs pure-JAX reference"

    # bf16-matmul path (f32 accumulation, f32 residual/LayerNorm) — production config.
    run_bf16 = jax.jit(functools.partial(incremental_residual_block,
                                         matmul_dtype=jnp.bfloat16))
    out_bf16 = jax.block_until_ready(run_bf16(x, params))
    assert out_bf16.shape == (B, S, W)
    assert bool(jnp.all(jnp.isfinite(out_bf16)))
    assert jnp.allclose(out_bf16, ref, atol=7.5e-2, rtol=7.5e-2), \
        "bf16 path deviates too far from f32 reference"

    print("KERNEL_OK")
</pallas_src>

<mosaic_0001>
module attributes {stable_mosaic.version = 11 : i64} {
  func.func @_incremental_residual_kernel(%arg0: i32, %arg1: memref<8x128xf32, #tpu.memory_space<vmem>>, %arg2: memref<128x256xf32, #tpu.memory_space<vmem>>, %arg3: memref<1x256xf32, #tpu.memory_space<vmem>>, %arg4: memref<128x128xf32, #tpu.memory_space<vmem>>, %arg5: memref<1x128xf32, #tpu.memory_space<vmem>>, %arg6: memref<128x128xf32, #tpu.memory_space<vmem>>, %arg7: memref<1x128xf32, #tpu.memory_space<vmem>>, %arg8: memref<1x128xf32, #tpu.memory_space<vmem>>, %arg9: memref<1x128xf32, #tpu.memory_space<vmem>>, %arg10: memref<1x1xf32, #tpu.memory_space<smem>>, %arg11: memref<8x128xf32, #tpu.memory_space<vmem>>) attributes {dimension_semantics = [#tpu.dimension_semantics<parallel>], iteration_bounds = array<i64: 2>, scalar_prefetch = 0 : i64, scratch_operands = 0 : i64, tpu.core_type = #tpu.core_type<tc>, window_params = [{transform_indices = @transform_0, window_bounds = array<i64: 8, 128>}, {pipeline_mode = #tpu.pipeline_mode<synchronous>, transform_indices = @transform_1, window_bounds = array<i64: 128, 256>}, {pipeline_mode = #tpu.pipeline_mode<synchronous>, transform_indices = @transform_2, window_bounds = array<i64: 1, 256>}, {pipeline_mode = #tpu.pipeline_mode<synchronous>, transform_indices = @transform_3, window_bounds = array<i64: 128, 128>}, {pipeline_mode = #tpu.pipeline_mode<synchronous>, transform_indices = @transform_4, window_bounds = array<i64: 1, 128>}, {pipeline_mode = #tpu.pipeline_mode<synchronous>, transform_indices = @transform_5, window_bounds = array<i64: 128, 128>}, {pipeline_mode = #tpu.pipeline_mode<synchronous>, transform_indices = @transform_6, window_bounds = array<i64: 1, 128>}, {pipeline_mode = #tpu.pipeline_mode<synchronous>, transform_indices = @transform_7, window_bounds = array<i64: 1, 128>}, {pipeline_mode = #tpu.pipeline_mode<synchronous>, transform_indices = @transform_8, window_bounds = array<i64: 1, 128>}, {transform_indices = @transform_9, window_bounds = array<i64: 1, 1>}, {transform_indices = @transform_10, window_bounds = array<i64: 8, 128>}]} {
    %c0 = arith.constant 0 : index
    %c0_0 = arith.constant 0 : index
    %0 = vector.load %arg1[%c0, %c0_0] : memref<8x128xf32, #tpu.memory_space<vmem>>, vector<8x128xf32>
    %c0_1 = arith.constant 0 : index
    %c0_2 = arith.constant 0 : index
    %1 = vector.load %arg2[%c0_1, %c0_2] : memref<128x256xf32, #tpu.memory_space<vmem>>, vector<128x256xf32>
    %cst = arith.constant dense<0.000000e+00> : vector<8x256xf32>
    %2 = tpu.matmul %0, %1, %cst {dimension_numbers = #tpu.dot_dimension_numbers<[1], [0], [0], [1], [0, 0, 1, 1], [], []>} : vector<8x128xf32>, vector<128x256xf32>, vector<8x256xf32> -> vector<8x256xf32>
    %c0_3 = arith.constant 0 : index
    %c0_4 = arith.constant 0 : index
    %3 = vector.load %arg3[%c0_3, %c0_4] : memref<1x256xf32, #tpu.memory_space<vmem>>, vector<1x256xf32>
    %4 = vector.broadcast %3 : vector<1x256xf32> to vector<8x256xf32>
    %5 = arith.addf %2, %4 : vector<8x256xf32>
    %cst_5 = arith.constant 0.000000e+00 : f32
    %6 = vector.broadcast %cst_5 : f32 to vector<8x256xf32>
    %7 = arith.maximumf %5, %6 : vector<8x256xf32>
    %8 = vector.extract_strided_slice %7 {offsets = [0, 0], sizes = [8, 128], strides = [1, 1]} : vector<8x256xf32> to vector<8x128xf32>
    %9 = vector.extract_strided_slice %7 {offsets = [0, 128], sizes = [8, 128], strides = [1, 1]} : vector<8x256xf32> to vector<8x128xf32>
    %c0_6 = arith.constant 0 : index
    %c0_7 = arith.constant 0 : index
    %10 = vector.load %arg4[%c0_6, %c0_7] : memref<128x128xf32, #tpu.memory_space<vmem>>, vector<128x128xf32>
    %cst_8 = arith.constant dense<0.000000e+00> : vector<8x128xf32>
    %11 = tpu.matmul %8, %10, %cst_8 {dimension_numbers = #tpu.dot_dimension_numbers<[1], [0], [0], [1], [0, 0, 1, 1], [], []>} : vector<8x128xf32>, vector<128x128xf32>, vector<8x128xf32> -> vector<8x128xf32>
    %c0_9 = arith.constant 0 : index
    %c0_10 = arith.constant 0 : index
    %12 = vector.load %arg5[%c0_9, %c0_10] : memref<1x128xf32, #tpu.memory_space<vmem>>, vector<1x128xf32>
    %13 = vector.broadcast %12 : vector<1x128xf32> to vector<8x128xf32>
    %14 = arith.addf %11, %13 : vector<8x128xf32>
    %c0_11 = arith.constant 0 : index
    %c0_12 = arith.constant 0 : index
    %15 = vector.load %arg6[%c0_11, %c0_12] : memref<128x128xf32, #tpu.memory_space<vmem>>, vector<128x128xf32>
    %cst_13 = arith.constant dense<0.000000e+00> : vector<8x128xf32>
    %16 = tpu.matmul %9, %15, %cst_13 {dimension_numbers = #tpu.dot_dimension_numbers<[1], [0], [0], [1], [0, 0, 1, 1], [], []>} : vector<8x128xf32>, vector<128x128xf32>, vector<8x128xf32> -> vector<8x128xf32>
    %c0_14 = arith.constant 0 : index
    %c0_15 = arith.constant 0 : index
    %17 = vector.load %arg7[%c0_14, %c0_15] : memref<1x128xf32, #tpu.memory_space<vmem>>, vector<1x128xf32>
    %18 = vector.broadcast %17 : vector<1x128xf32> to vector<8x128xf32>
    %19 = arith.addf %16, %18 : vector<8x128xf32>
    %20 = arith.negf %19 : vector<8x128xf32>
    %21 = math.exp %20 : vector<8x128xf32>
    %cst_16 = arith.constant 1.000000e+00 : f32
    %22 = vector.broadcast %cst_16 : f32 to vector<8x128xf32>
    %23 = arith.addf %22, %21 : vector<8x128xf32>
    %24 = arith.divf %22, %23 : vector<8x128xf32>
    %c0_17 = arith.constant 0 : index
    %c0_18 = arith.constant 0 : index
    %25 = memref.load %arg10[%c0_17, %c0_18] : memref<1x1xf32, #tpu.memory_space<smem>>
    %26 = arith.mulf %14, %24 : vector<8x128xf32>
    %cst_19 = arith.constant 1.000000e+00 : f32
    %27 = vector.broadcast %cst_19 : f32 to vector<8x128xf32>
    %28 = arith.subf %27, %24 : vector<8x128xf32>
    %29 = arith.mulf %0, %28 : vector<8x128xf32>
    %30 = vector.broadcast %25 : f32 to vector<8x128xf32>
    %31 = arith.mulf %29, %30 : vector<8x128xf32>
    %32 = arith.addf %26, %31 : vector<8x128xf32>
    %cst_20 = arith.constant dense<0.000000e+00> : vector<8xf32>
    %33 = vector.multi_reduction <add>, %32, %cst_20 [1] : vector<8x128xf32> to vector<8xf32>
    %34 = vector.shape_cast %33 : vector<8xf32> to vector<8x1xf32>
    %cst_21 = arith.constant 3.125000e-02 : f32
    %35 = vector.broadcast %cst_21 : f32 to vector<8x1xf32>
    %36 = arith.mulf %34, %35 : vector<8x1xf32>
    %37 = vector.broadcast %36 : vector<8x1xf32> to vector<8x128xf32>
    %38 = arith.subf %32, %37 : vector<8x128xf32>
    %39 = arith.mulf %38, %38 : vector<8x128xf32>
    %cst_22 = arith.constant dense<0.000000e+00> : vector<8xf32>
    %40 = vector.multi_reduction <add>, %39, %cst_22 [1] : vector<8x128xf32> to vector<8xf32>
    %41 = vector.shape_cast %40 : vector<8xf32> to vector<8x1xf32>
    %42 = arith.mulf %36, %36 : vector<8x1xf32>
    %cst_23 = arith.constant 9.600000e+01 : f32
    %43 = vector.broadcast %cst_23 : f32 to vector<8x1xf32>
    %44 = arith.mulf %43, %42 : vector<8x1xf32>
    %45 = arith.subf %41, %44 : vector<8x1xf32>
    %cst_24 = arith.constant 3.125000e-02 : f32
    %46 = vector.broadcast %cst_24 : f32 to vector<8x1xf32>
    %47 = arith.mulf %45, %46 : vector<8x1xf32>
    %cst_25 = arith.constant 9.99999974E-6 : f32
    %48 = vector.broadcast %cst_25 : f32 to vector<8x1xf32>
    %49 = arith.addf %47, %48 : vector<8x1xf32>
    %50 = math.rsqrt %49 : vector<8x1xf32>
    %51 = vector.broadcast %50 : vector<8x1xf32> to vector<8x128xf32>
    %52 = arith.mulf %38, %51 : vector<8x128xf32>
    %c0_26 = arith.constant 0 : index
    %c0_27 = arith.constant 0 : index
    %53 = vector.load %arg8[%c0_26, %c0_27] : memref<1x128xf32, #tpu.memory_space<vmem>>, vector<1x128xf32>
    %54 = vector.broadcast %53 : vector<1x128xf32> to vector<8x128xf32>
    %55 = arith.mulf %52, %54 : vector<8x128xf32>
    %c0_28 = arith.constant 0 : index
    %c0_29 = arith.constant 0 : index
    %56 = vector.load %arg9[%c0_28, %c0_29] : memref<1x128xf32, #tpu.memory_space<vmem>>, vector<1x128xf32>
    %57 = vector.broadcast %56 : vector<1x128xf32> to vector<8x128xf32>
    %58 = arith.addf %55, %57 : vector<8x128xf32>
    %c0_30 = arith.constant 0 : index
    %c0_31 = arith.constant 0 : index
    %59 = vector.load %arg11[%c0_30, %c0_31] : memref<8x128xf32, #tpu.memory_space<vmem>>, vector<8x128xf32>
    tpu.vector_store %arg11[%c0_30, %c0_31], %58 {strides = array<i32>} : memref<8x128xf32, #tpu.memory_space<vmem>>, vector<8x128xf32>,
    return
  }
  func.func @transform_0(%arg0: i32) -> (i32, i32) {
    %c0_i32 = arith.constant 0 : i32
    %c0_i32_0 = arith.constant 0 : i32
    return %arg0, %c0_i32 : i32, i32
  }
  func.func @transform_1(%arg0: i32) -> (i32, i32) {
    %c0_i32 = arith.constant 0 : i32
    %c0_i32_0 = arith.constant 0 : i32
    %c0_i32_1 = arith.constant 0 : i32
    return %c0_i32, %c0_i32_0 : i32, i32
  }
  func.func @transform_2(%arg0: i32) -> (i32, i32) {
    %c0_i32 = arith.constant 0 : i32
    %c0_i32_0 = arith.constant 0 : i32
    %c0_i32_1 = arith.constant 0 : i32
    return %c0_i32, %c0_i32_0 : i32, i32
  }
  func.func @transform_3(%arg0: i32) -> (i32, i32) {
    %c0_i32 = arith.constant 0 : i32
    %c0_i32_0 = arith.constant 0 : i32
    %c0_i32_1 = arith.constant 0 : i32
    return %c0_i32, %c0_i32_0 : i32, i32
  }
  func.func @transform_4(%arg0: i32) -> (i32, i32) {
    %c0_i32 = arith.constant 0 : i32
    %c0_i32_0 = arith.constant 0 : i32
    %c0_i32_1 = arith.constant 0 : i32
    return %c0_i32, %c0_i32_0 : i32, i32
  }
  func.func @transform_5(%arg0: i32) -> (i32, i32) {
    %c0_i32 = arith.constant 0 : i32
    %c0_i32_0 = arith.constant 0 : i32
    %c0_i32_1 = arith.constant 0 : i32
    return %c0_i32, %c0_i32_0 : i32, i32
  }
  func.func @transform_6(%arg0: i32) -> (i32, i32) {
    %c0_i32 = arith.constant 0 : i32
    %c0_i32_0 = arith.constant 0 : i32
    %c0_i32_1 = arith.constant 0 : i32
    return %c0_i32, %c0_i32_0 : i32, i32
  }
  func.func @transform_7(%arg0: i32) -> (i32, i32) {
    %c0_i32 = arith.constant 0 : i32
    %c0_i32_0 = arith.constant 0 : i32
    %c0_i32_1 = arith.constant 0 : i32
    return %c0_i32, %c0_i32_0 : i32, i32
  }
  func.func @transform_8(%arg0: i32) -> (i32, i32) {
    %c0_i32 = arith.constant 0 : i32
    %c0_i32_0 = arith.constant 0 : i32
    %c0_i32_1 = arith.constant 0 : i32
    return %c0_i32, %c0_i32_0 : i32, i32
  }
  func.func @transform_9(%arg0: i32) -> (i32, i32) {
    %c0_i32 = arith.constant 0 : i32
    %c0_i32_0 = arith.constant 0 : i32
    %c0_i32_1 = arith.constant 0 : i32
    return %c0_i32, %c0_i32_0 : i32, i32
  }
  func.func @transform_10(%arg0: i32) -> (i32, i32) {
    %c0_i32 = arith.constant 0 : i32
    %c0_i32_0 = arith.constant 0 : i32
    return %arg0, %c0_i32 : i32, i32
  }
}

</mosaic_0001>

<llo_original>
// kernel: incremental_residual_block.1
$region0: #{incremental_residual_block.1}
  #allocation0 [shape = 'u32[]', space=smem, size = 0x4, offset = 0x4, fixed_abs, tag = 'smem constant byte address 0x4 - core index']
  #allocation1 [shape = 'u32[144,128]{1,0:T(1,128)}', space=vmem, size = 0x12000, scoped, tag = 'internal scratch']
  #allocation2 [shape = 'f32[1,1]{1,0:T(1,128)S(6)}', space=smem, size = 0x200, scoped, tag = 'scoped memory for incremental_residual_block.1']
  %s0 = inlined_call_operand.vmem [shape: f32[16,128], index: 0, kind: input, shape index: {}]
  %s1 = inlined_call_operand.vmem [shape: f32[128,256], index: 1, kind: input, shape index: {}]
  %s2 = inlined_call_operand.vmem [shape: f32[1,256], index: 2, kind: input, shape index: {}]
  %s3 = inlined_call_operand.vmem [shape: f32[128,128], index: 3, kind: input, shape index: {}]
  %s4 = inlined_call_operand.vmem [shape: f32[1,128], index: 4, kind: input, shape index: {}]
  %s5 = inlined_call_operand.vmem [shape: f32[128,128], index: 5, kind: input, shape index: {}]
  %s6 = inlined_call_operand.vmem [shape: f32[1,128], index: 6, kind: input, shape index: {}]
  %s7 = inlined_call_operand.vmem [shape: f32[1,128], index: 7, kind: input, shape index: {}]
  %s8 = inlined_call_operand.vmem [shape: f32[1,128], index: 8, kind: input, shape index: {}]
  %s9 = inlined_call_operand.<no memory space> [shape: f32[1,1], index: 9, kind: input, shape index: {}]
  %s10 = inlined_call_operand.vmem [shape: f32[16,128], index: 10, kind: output, shape index: {}]
  %s11 = sld [smem:[#allocation0]]
  $region73: #{incremental_residual_block.1} parent=0
    _
  %s13 = ssub.s32 1, %s11
  %s14 = scalar_select 0, %s13, %s11
  %15 = sst [smem:[#allocation2]] %s9
  loop: start=0, step=1, limit=4
  $region2: #{incremental_residual_block.1} parent=0 // loop_pre_header
    _
  $region3: #{incremental_residual_block.1} parent=0 // loop_header
    %s17 = sphi 0, %s21
    %p18 = scmp.ge.s32.totalorder %s17, 4
    %s27 = sphi 0, %s29
    %s30 = sphi 0, %s27
    %s31 = sphi 0, %s30
    %s47 = sphi 0, %s31
    %s51 = sphi 0, %s51
    %s53 = sphi 0, %s51
    %s54 = sphi 0, %s53
    %s68 = sphi 0, %s54
    %s72 = sphi 0, %s72
    %s74 = sphi 0, %s72
    %s75 = sphi 0, %s74
    %s89 = sphi 0, %s75
    %s93 = sphi 0, %s93
    %s95 = sphi 0, %s93
    %s96 = sphi 0, %s95
    %s110 = sphi 0, %s96
    %s114 = sphi 0, %s114
    %s116 = sphi 0, %s114
    %s117 = sphi 0, %s116
    %s131 = sphi 0, %s117
    %s135 = sphi 0, %s135
    %s137 = sphi 0, %s135
    %s138 = sphi 0, %s137
    %s152 = sphi 0, %s138
    %s156 = sphi 0, %s156
    %s158 = sphi 0, %s156
    %s159 = sphi 0, %s158
    %s173 = sphi 0, %s159
    %s177 = sphi 0, %s177
    %s179 = sphi 0, %s177
    %s180 = sphi 0, %s179
    %s194 = sphi 0, %s180
    %s198 = sphi 0, %s198
    %s200 = sphi 0, %s198
    %s201 = sphi 0, %s200
    %s215 = sphi 0, %s201
    %s219 = sphi 0, %s219
    %s221 = sphi 0, %s219
    %s222 = sphi 0, %s221
    %s236 = sphi 0, %s222
    %s242 = sphi 0, %s244
    %s245 = sphi 0, %s242
    %s246 = sphi 0, %s245
    %s262 = sphi 0, %s246
  $region4: #{incremental_residual_block.1} parent=0 // loop_header_branch
    %20 = sbr.rel (%p18) target = $region8
  $region5: #{incremental_residual_block.1} parent=0 // loop_body
    %s22 = ssub.s32 %s17, 1
    %s23 = ssub.s32 %s17, 2
    %s24 = sadd.s32 %s17, 1
    %s25 = ssub.s32 %s17, %s24
    %p26 = scmp.eq.s32.totalorder %s25, 0
    %s28 = sadd.s32 %s27, 1
    %s29 = scalar_select %p26, %s27, %s28
    %p32 = pneg %p26
    %p33 = scmp.eq.s32.totalorder %s17, 1
    %p34 = por %p32, %p33
    %p35 = scmp.ne.s32.totalorder %s27, %s30
    %p36 = scmp.eq.s32.totalorder %s17, 0
    %p37 = por %p35, %p36
    %p38 = scmp.ne.s32.totalorder %s27, %s30
    %p39 = scmp.eq.s32.totalorder %s22, 1
    %p40 = por %p38, %p39
    %p41 = scmp.ne.s32.totalorder %s30, %s31
    %p42 = scmp.eq.s32.totalorder %s22, 0
    %p43 = por %p41, %p42
    %p44 = scmp.ne.s32.totalorder %s30, %s31
    %p45 = scmp.eq.s32.totalorder %s23, 1
    %p46 = por %p44, %p45
    %p48 = scmp.ne.s32.totalorder %s31, %s47
    %p49 = scmp.eq.s32.totalorder %s23, 0
    %p50 = por %p48, %p49
    %s52 = sadd.s32 %s51, 1
    %p55 = scmp.eq.s32.totalorder %s17, 1
    %p56 = scmp.ne.s32.totalorder %s51, %s53
    %p57 = scmp.eq.s32.totalorder %s17, 0
    %p58 = por %p56, %p57
    %p59 = scmp.ne.s32.totalorder %s51, %s53
    %p60 = scmp.eq.s32.totalorder %s22, 1
    %p61 = por %p59, %p60
    %p62 = scmp.ne.s32.totalorder %s53, %s54
    %p63 = scmp.eq.s32.totalorder %s22, 0
    %p64 = por %p62, %p63
    %p65 = scmp.ne.s32.totalorder %s53, %s54
    %p66 = scmp.eq.s32.totalorder %s23, 1
    %p67 = por %p65, %p66
    %p69 = scmp.ne.s32.totalorder %s54, %s68
    %p70 = scmp.eq.s32.totalorder %s23, 0
    %p71 = por %p69, %p70
    %s73 = sadd.s32 %s72, 1
    %p76 = scmp.eq.s32.totalorder %s17, 1
    %p77 = scmp.ne.s32.totalorder %s72, %s74
    %p78 = scmp.eq.s32.totalorder %s17, 0
    %p79 = por %p77, %p78
    %p80 = scmp.ne.s32.totalorder %s72, %s74
    %p81 = scmp.eq.s32.totalorder %s22, 1
    %p82 = por %p80, %p81
    %p83 = scmp.ne.s32.totalorder %s74, %s75
    %p84 = scmp.eq.s32.totalorder %s22, 0
    %p85 = por %p83, %p84
    %p86 = scmp.ne.s32.totalorder %s74, %s75
    %p87 = scmp.eq.s32.totalorder %s23, 1
    %p88 = por %p86, %p87
    %p90 = scmp.ne.s32.totalorder %s75, %s89
    %p91 = scmp.eq.s32.totalorder %s23, 0
    %p92 = por %p90, %p91
    %s94 = sadd.s32 %s93, 1
    %p97 = scmp.eq.s32.totalorder %s17, 1
    %p98 = scmp.ne.s32.totalorder %s93, %s95
    %p99 = scmp.eq.s32.totalorder %s17, 0
    %p100 = por %p98, %p99
    %p101 = scmp.ne.s32.totalorder %s93, %s95
    %p102 = scmp.eq.s32.totalorder %s22, 1
    %p103 = por %p101, %p102
    %p104 = scmp.ne.s32.totalorder %s95, %s96
    %p105 = scmp.eq.s32.totalorder %s22, 0
    %p106 = por %p104, %p105
    %p107 = scmp.ne.s32.totalorder %s95, %s96
    %p108 = scmp.eq.s32.totalorder %s23, 1
    %p109 = por %p107, %p108
    %p111 = scmp.ne.s32.totalorder %s96, %s110
    %p112 = scmp.eq.s32.totalorder %s23, 0
    %p113 = por %p111, %p112
    %s115 = sadd.s32 %s114, 1
    %p118 = scmp.eq.s32.totalorder %s17, 1
    %p119 = scmp.ne.s32.totalorder %s114, %s116
    %p120 = scmp.eq.s32.totalorder %s17, 0
    %p121 = por %p119, %p120
    %p122 = scmp.ne.s32.totalorder %s114, %s116
    %p123 = scmp.eq.s32.totalorder %s22, 1
    %p124 = por %p122, %p123
    %p125 = scmp.ne.s32.totalorder %s116, %s117
    %p126 = scmp.eq.s32.totalorder %s22, 0
    %p127 = por %p125, %p126
    %p128 = scmp.ne.s32.totalorder %s116, %s117
    %p129 = scmp.eq.s32.totalorder %s23, 1
    %p130 = por %p128, %p129
    %p132 = scmp.ne.s32.totalorder %s117, %s131
    %p133 = scmp.eq.s32.totalorder %s23, 0
    %p134 = por %p132, %p133
    %s136 = sadd.s32 %s135, 1
    %p139 = scmp.eq.s32.totalorder %s17, 1
    %p140 = scmp.ne.s32.totalorder %s135, %s137
    %p141 = scmp.eq.s32.totalorder %s17, 0
    %p142 = por %p140, %p141
    %p143 = scmp.ne.s32.totalorder %s135, %s137
    %p144 = scmp.eq.s32.totalorder %s22, 1
    %p145 = por %p143, %p144
    %p146 = scmp.ne.s32.totalorder %s137, %s138
    %p147 = scmp.eq.s32.totalorder %s22, 0
    %p148 = por %p146, %p147
    %p149 = scmp.ne.s32.totalorder %s137, %s138
    %p150 = scmp.eq.s32.totalorder %s23, 1
    %p151 = por %p149, %p150
    %p153 = scmp.ne.s32.totalorder %s138, %s152
    %p154 = scmp.eq.s32.totalorder %s23, 0
    %p155 = por %p153, %p154
    %s157 = sadd.s32 %s156, 1
    %p160 = scmp.eq.s32.totalorder %s17, 1
    %p161 = scmp.ne.s32.totalorder %s156, %s158
    %p162 = scmp.eq.s32.totalorder %s17, 0
    %p163 = por %p161, %p162
    %p164 = scmp.ne.s32.totalorder %s156, %s158
    %p165 = scmp.eq.s32.totalorder %s22, 1
    %p166 = por %p164, %p165
    %p167 = scmp.ne.s32.totalorder %s158, %s159
    %p168 = scmp.eq.s32.totalorder %s22, 0
    %p169 = por %p167, %p168
    %p170 = scmp.ne.s32.totalorder %s158, %s159
    %p171 = scmp.eq.s32.totalorder %s23, 1
    %p172 = por %p170, %p171
    %p174 = scmp.ne.s32.totalorder %s159, %s173
    %p175 = scmp.eq.s32.totalorder %s23, 0
    %p176 = por %p174, %p175
    %s178 = sadd.s32 %s177, 1
    %p181 = scmp.eq.s32.totalorder %s17, 1
    %p182 = scmp.ne.s32.totalorder %s177, %s179
    %p183 = scmp.eq.s32.totalorder %s17, 0
    %p184 = por %p182, %p183
    %p185 = scmp.ne.s32.totalorder %s177, %s179
    %p186 = scmp.eq.s32.totalorder %s22, 1
    %p187 = por %p185, %p186
    %p188 = scmp.ne.s32.totalorder %s179, %s180
    %p189 = scmp.eq.s32.totalorder %s22, 0
    %p190 = por %p188, %p189
    %p191 = scmp.ne.s32.totalorder %s179, %s180
    %p192 = scmp.eq.s32.totalorder %s23, 1
    %p193 = por %p191, %p192
    %p195 = scmp.ne.s32.totalorder %s180, %s194
    %p196 = scmp.eq.s32.totalorder %s23, 0
    %p197 = por %p195, %p196
    %s199 = sadd.s32 %s198, 1
    %p202 = scmp.eq.s32.totalorder %s17, 1
    %p203 = scmp.ne.s32.totalorder %s198, %s200
    %p204 = scmp.eq.s32.totalorder %s17, 0
    %p205 = por %p203, %p204
    %p206 = scmp.ne.s32.totalorder %s198, %s200
    %p207 = scmp.eq.s32.totalorder %s22, 1
    %p208 = por %p206, %p207
    %p209 = scmp.ne.s32.totalorder %s200, %s201
    %p210 = scmp.eq.s32.totalorder %s22, 0
    %p211 = por %p209, %p210
    %p212 = scmp.ne.s32.totalorder %s200, %s201
    %p213 = scmp.eq.s32.totalorder %s23, 1
    %p214 = por %p212, %p213
    %p216 = scmp.ne.s32.totalorder %s201, %s215
    %p217 = scmp.eq.s32.totalorder %s23, 0
    %p218 = por %p216, %p217
    %s220 = sadd.s32 %s219, 1
    %p223 = scmp.eq.s32.totalorder %s17, 1
    %p224 = scmp.ne.s32.totalorder %s219, %s221
    %p225 = scmp.eq.s32.totalorder %s17, 0
    %p226 = por %p224, %p225
    %p227 = scmp.ne.s32.totalorder %s219, %s221
    %p228 = scmp.eq.s32.totalorder %s22, 1
    %p229 = por %p227, %p228
    %p230 = scmp.ne.s32.totalorder %s221, %s222
    %p231 = scmp.eq.s32.totalorder %s22, 0
    %p232 = por %p230, %p231
    %p233 = scmp.ne.s32.totalorder %s221, %s222
    %p234 = scmp.eq.s32.totalorder %s23, 1
    %p235 = por %p233, %p234
    %p237 = scmp.ne.s32.totalorder %s222, %s236
    %p238 = scmp.eq.s32.totalorder %s23, 0
    %p239 = por %p237, %p238
    %s240 = ssub.s32 %s17, %s24
    %p241 = scmp.eq.s32.totalorder %s240, 0
    %s243 = sadd.s32 %s242, 1
    %s244 = scalar_select %p241, %s242, %s243
    %p247 = pneg %p241
    %p248 = scmp.eq.s32.totalorder %s17, 1
    %p249 = por %p247, %p248
    %p250 = scmp.ne.s32.totalorder %s242, %s245
    %p251 = scmp.eq.s32.totalorder %s17, 0
    %p252 = por %p250, %p251
    %p253 = scmp.ne.s32.totalorder %s242, %s245
    %p254 = scmp.eq.s32.totalorder %s22, 1
    %p255 = por %p253, %p254
    %p256 = scmp.ne.s32.totalorder %s245, %s246
    %p257 = scmp.eq.s32.totalorder %s22, 0
    %p258 = por %p256, %p257
    %p259 = scmp.ne.s32.totalorder %s245, %s246
    %p260 = scmp.eq.s32.totalorder %s23, 1
    %p261 = por %p259, %p260
    %p263 = scmp.ne.s32.totalorder %s246, %s262
    %p264 = scmp.eq.s32.totalorder %s23, 0
    %p265 = por %p263, %p264
    %p266 = scmp.le.s32.totalorder 1, %s17
    %p267 = scmp.lt.s32.totalorder %s17, 3
    %p268 = pnand %p266, %p267
    %p269 = pneg %p268
    // Predicated region
    $region9: #{incremental_residual_block.1} parent=5 // pred_check
      _
    $region10: #{incremental_residual_block.1} parent=5 // pred_check_branch
      %271 = sbr.rel (%p268) target = $region12
    $region11: #{incremental_residual_block.1} parent=5 // pred_region
      %s272 = ssub.s32 %s17, 1
      // Predicated region
      $region13: #{incremental_residual_block.1} parent=11 // pred_check
        %p273 = pneg %p64
      $region14: #{incremental_residual_block.1} parent=11 // pred_check_branch
        %275 = sbr.rel (%p273) target = $region16
      $region15: #{incremental_residual_block.1} parent=11 // pred_region
        _
      $region16: #{incremental_residual_block.1} parent=11 // pred_fallthru
        _
      // Predicated region
      $region17: #{incremental_residual_block.1} parent=11 // pred_check
        %p276 = pneg %p85
      $region18: #{incremental_residual_block.1} parent=11 // pred_check_branch
        %278 = sbr.rel (%p276) target = $region20
      $region19: #{incremental_residual_block.1} parent=11 // pred_region
        _
      $region20: #{incremental_residual_block.1} parent=11 // pred_fallthru
        _
      // Predicated region
      $region21: #{incremental_residual_block.1} parent=11 // pred_check
        %p279 = pneg %p106
      $region22: #{incremental_residual_block.1} parent=11 // pred_check_branch
        %281 = sbr.rel (%p279) target = $region24
      $region23: #{incremental_residual_block.1} parent=11 // pred_region
        _
      $region24: #{incremental_residual_block.1} parent=11 // pred_fallthru
        _
      // Predicated region
      $region25: #{incremental_residual_block.1} parent=11 // pred_check
        %p282 = pneg %p127
      $region26: #{incremental_residual_block.1} parent=11 // pred_check_branch
        %284 = sbr.rel (%p282) target = $region28
      $region27: #{incremental_residual_block.1} parent=11 // pred_region
        _
      $region28: #{incremental_residual_block.1} parent=11 // pred_fallthru
        _
      // Predicated region
      $region29: #{incremental_residual_block.1} parent=11 // pred_check
        %p285 = pneg %p148
      $region30: #{incremental_residual_block.1} parent=11 // pred_check_branch
        %287 = sbr.rel (%p285) target = $region32
      $region31: #{incremental_residual_block.1} parent=11 // pred_region
        _
      $region32: #{incremental_residual_block.1} parent=11 // pred_fallthru
        _
      // Predicated region
      $region33: #{incremental_residual_block.1} parent=11 // pred_check
        %p288 = pneg %p169
      $region34: #{incremental_residual_block.1} parent=11 // pred_check_branch
        %290 = sbr.rel (%p288) target = $region36
      $region35: #{incremental_residual_block.1} parent=11 // pred_region
        _
      $region36: #{incremental_residual_block.1} parent=11 // pred_fallthru
        _
      // Predicated region
      $region37: #{incremental_residual_block.1} parent=11 // pred_check
        %p291 = pneg %p190
      $region38: #{incremental_residual_block.1} parent=11 // pred_check_branch
        %293 = sbr.rel (%p291) target = $region40
      $region39: #{incremental_residual_block.1} parent=11 // pred_region
        _
      $region40: #{incremental_residual_block.1} parent=11 // pred_fallthru
        _
      // Predicated region
      $region41: #{incremental_residual_block.1} parent=11 // pred_check
        %p294 = pneg %p211
      $region42: #{incremental_residual_block.1} parent=11 // pred_check_branch
        %296 = sbr.rel (%p294) target = $region44
      $region43: #{incremental_residual_block.1} parent=11 // pred_region
        _
      $region44: #{incremental_residual_block.1} parent=11 // pred_fallthru
        _
      // Predicated region
      $region45: #{incremental_residual_block.1} parent=11 // pred_check
        %p297 = pneg %p232
      $region46: #{incremental_residual_block.1} parent=11 // pred_check_branch
        %299 = sbr.rel (%p297) target = $region48
      $region47: #{incremental_residual_block.1} parent=11 // pred_region
        _
      $region48: #{incremental_residual_block.1} parent=11 // pred_fallthru
        _
    $region12: #{incremental_residual_block.1} parent=5 // pred_fallthru
      _
    %p300 = scmp.lt.s32.totalorder %s17, 2
    // Predicated region
    $region49: #{incremental_residual_block.1} parent=5 // pred_check
      %p301 = pneg %p300
    $region50: #{incremental_residual_block.1} parent=5 // pred_check_branch
      %303 = sbr.rel (%p301) target = $region52
    $region51: #{incremental_residual_block.1} parent=5 // pred_region
      // Predicated region
      $region53: #{incremental_residual_block.1} parent=51 // pred_check
        %p304 = pneg %p37
      $region54: #{incremental_residual_block.1} parent=51 // pred_check_branch
        %306 = sbr.rel (%p304) target = $region56
      $region55: #{incremental_residual_block.1} parent=51 // pred_region
        %p307 = scmp.lt.s32.totalorder %s17, 1
        %s308 = scalar_select %p307, %s17, 1
        %s309 = smul.addr %s308, 8
        %s310 = scalar_lea.vmem %s0, %s309
      $region56: #{incremental_residual_block.1} parent=51 // pred_fallthru
        _
    $region52: #{incremental_residual_block.1} parent=5 // pred_fallthru
      _
    %p311 = scmp.le.s32.totalorder 1, %s17
    %p312 = scmp.lt.s32.totalorder %s17, 3
    %p313 = pnand %p311, %p312
    %p314 = pneg %p313
    // Predicated region
    $region57: #{incremental_residual_block.1} parent=5 // pred_check
      _
    $region58: #{incremental_residual_block.1} parent=5 // pred_check_branch
      %316 = sbr.rel (%p313) target = $region60
    $region59: #{incremental_residual_block.1} parent=5 // pred_region
      %s317 = ssub.s32 %s17, 1
      %p318 = scmp.lt.s32.totalorder %s22, 1
      %s319 = scalar_select %p318, %s22, 1
      %s320 = smul.addr %s319, 8
      %s321 = scalar_lea.vmem %s0, %s320
      %p322 = pneg %p43
      %p323 = pneg %p40
      %p324 = pneg %p64
      %p325 = pneg %p61
      %p326 = pneg %p85
      %p327 = pneg %p82
      %p328 = pneg %p106
      %p329 = pneg %p103
      %p330 = pneg %p127
      %p331 = pneg %p124
      %p332 = pneg %p148
      %p333 = pneg %p145
      %p334 = pneg %p169
      %p335 = pneg %p166
      %p336 = pneg %p190
      %p337 = pneg %p187
      %p338 = pneg %p211
      %p339 = pneg %p208
      %p340 = pneg %p232
      %p341 = pneg %p229
      %p342 = pneg %p258
      %p343 = pneg %p255
      %p344 = scmp.lt.s32.totalorder %s22, 1
      %s345 = scalar_select %p344, %s22, 1
      %s346 = smul.addr %s345, 8
      %s347 = scalar_lea.vmem %s10, %s346
      %p348 = scmp.lt.s32.totalorder %s22, 1
      %s349 = scalar_select %p348, %s22, 1
      %s350 = smul.addr %s349, 8
      %s351 = scalar_lea.vmem %s0, %s350
      %p352 = scmp.lt.s32.totalorder %s22, 1
      %s353 = scalar_select %p352, %s22, 1
      %s354 = smul.addr %s353, 8
      %s355 = scalar_lea.vmem %s10, %s354
      %v356 = vld [vmem:[%s351] sm:$0xff]
      %v357 = vld [vmem:[%s1] sm:$0xff]
      %v358 = vld [vmem:[%s1 + $0x8] sm:$0xff]
      %v359 = vld [vmem:[%s1 + $0x10] sm:$0xff]
      %v360 = vld [vmem:[%s1 + $0x18] sm:$0xff]
      %v361 = vld [vmem:[%s1 + $0x20] sm:$0xff]
      %v362 = vld [vmem:[%s1 + $0x28] sm:$0xff]
      %v363 = vld [vmem:[%s1 + $0x30] sm:$0xff]
      %v364 = vld [vmem:[%s1 + $0x38] sm:$0xff]
      %v365 = vld [vmem:[%s1 + $0x40] sm:$0xff]
      %v366 = vld [vmem:[%s1 + $0x48] sm:$0xff]
      %v367 = vld [vmem:[%s1 + $0x50] sm:$0xff]
      %v368 = vld [vmem:[%s1 + $0x58] sm:$0xff]
      %v369 = vld [vmem:[%s1 + $0x60] sm:$0xff]
      %v370 = vld [vmem:[%s1 + $0x68] sm:$0xff]
      %v371 = vld [vmem:[%s1 + $0x70] sm:$0xff]
      %v372 = vld [vmem:[%s1 + $0x78] sm:$0xff]
      %v373 = vld [vmem:[%s1 + $0x80] sm:$0xff]
      %v374 = vld [vmem:[%s1 + $0x88] sm:$0xff]
      %v375 = vld [vmem:[%s1 + $0x90] sm:$0xff]
      %v376 = vld [vmem:[%s1 + $0x98] sm:$0xff]
      %v377 = vld [vmem:[%s1 + $0xa0] sm:$0xff]
      %v378 = vld [vmem:[%s1 + $0xa8] sm:$0xff]
      %v379 = vld [vmem:[%s1 + $0xb0] sm:$0xff]
      %v380 = vld [vmem:[%s1 + $0xb8] sm:$0xff]
      %v381 = vld [vmem:[%s1 + $0xc0] sm:$0xff]
      %v382 = vld [vmem:[%s1 + $0xc8] sm:$0xff]
      %v383 = vld [vmem:[%s1 + $0xd0] sm:$0xff]
      %v384 = vld [vmem:[%s1 + $0xd8] sm:$0xff]
      %v385 = vld [vmem:[%s1 + $0xe0] sm:$0xff]
      %v386 = vld [vmem:[%s1 + $0xe8] sm:$0xff]
      %v387 = vld [vmem:[%s1 + $0xf0] sm:$0xff]
      %v388 = vld [vmem:[%s1 + $0xf8] sm:$0xff]
      %v389 = vld [vmem:[%s2] sm:$0x3]
      %v391 = vlaneseq
      %v392 = vshrl.u32 %v391, 7
      %v393 = vsub.s32 0, %v392
      %v394 = vrot.slane %v389, %v393
      %v395 = vlaneseq
      %v396 = vshrl.u32 %v395, 7
      %v397 = vsub.s32 1, %v396
      %v398 = vrot.slane %v389, %v397
      %401 = vmatprep.subr.mxu0 %v358
      %402 = vmatpush1.msra.mxu0 %v357
      %403 = vmatprep.subr.mxu0 %v360
      %404 = vmatpush1.msra.mxu0 %v359
      %405 = vmatprep.subr.mxu0 %v362
      %406 = vmatpush1.msra.mxu0 %v361
      %407 = vmatprep.subr.mxu0 %v364
      %408 = vmatpush1.msra.mxu0 %v363
      %409 = vmatprep.subr.mxu0 %v366
      %410 = vmatpush1.msra.mxu0 %v365
      %411 = vmatprep.subr.mxu0 %v368
      %412 = vmatpush1.msra.mxu0 %v367
      %413 = vmatprep.subr.mxu0 %v370
      %414 = vmatpush1.msra.mxu0 %v369
      %415 = vmatprep.subr.mxu0 %v372
      %416 = vmatpush1.msra.mxu0 %v371
      %417 = vmatprep.subr.mxu0 %v374
      %418 = vmatpush1.msra.mxu0 %v373
      %419 = vmatprep.subr.mxu0 %v376
      %420 = vmatpush1.msra.mxu0 %v375
      %421 = vmatprep.subr.mxu0 %v378
      %422 = vmatpush1.msra.mxu0 %v377
      %423 = vmatprep.subr.mxu0 %v380
      %424 = vmatpush1.msra.mxu0 %v379
      %425 = vmatprep.subr.mxu0 %v382
      %426 = vmatpush1.msra.mxu0 %v381
      %427 = vmatprep.subr.mxu0 %v384
      %428 = vmatpush1.msra.mxu0 %v383
      %429 = vmatprep.subr.mxu0 %v386
      %430 = vmatpush1.msra.mxu0 %v385
      %431 = vmatprep.subr.mxu0 %v388
      %432 = vmatpush1.msra.mxu0 %v387
      %433 = vmatprep.subr.mxu0 0.0
      %434 = vmatpush1.msra.mxu0 0.0
      %435 = vmatprep.subr.mxu0 0.0
      %436 = vmatpush1.msra.mxu0 0.0
      %437 = vmatprep.subr.mxu0 0.0
      %438 = vmatpush1.msra.mxu0 0.0
      %439 = vmatprep.subr.mxu0 0.0
      %440 = vmatpush1.msra.mxu0 0.0
      %441 = vmatprep.subr.mxu0 0.0
      %442 = vmatpush1.msra.mxu0 0.0
      %443 = vmatprep.subr.mxu0 0.0
      %444 = vmatpush1.msra.mxu0 0.0
      %445 = vmatprep.subr.mxu0 0.0
      %446 = vmatpush1.msra.mxu0 0.0
      %447 = vmatprep.subr.mxu0 0.0
      %448 = vmatpush1.msra.mxu0 0.0
      %449 = vmatprep.subr.mxu0 0.0
      %450 = vmatpush1.msra.mxu0 0.0
      %451 = vmatprep.subr.mxu0 0.0
      %452 = vmatpush1.msra.mxu0 0.0
      %453 = vmatprep.subr.mxu0 0.0
      %454 = vmatpush1.msra.mxu0 0.0
      %455 = vmatprep.subr.mxu0 0.0
      %456 = vmatpush1.msra.mxu0 0.0
      %457 = vmatprep.subr.mxu0 0.0
      %458 = vmatpush1.msra.mxu0 0.0
      %459 = vmatprep.subr.mxu0 0.0
      %460 = vmatpush1.msra.mxu0 0.0
      %461 = vmatprep.subr.mxu0 0.0
      %462 = vmatpush1.msra.mxu0 0.0
      %463 = vmatprep.subr.mxu0 0.0
      %464 = vmatpush1.msra.mxu0 0.0
      %465 = vmatprep.mubr.f32.mxu0 0.0
      %466 = vmatmul.mubr.f32.gmra.mrb[0].mxu0 %v356
      %v467 = vpop.f32.mrb[0].mxu0
      %v468 = vadd.f32 %v394, %v467
      %v469 = vpop.f32.mrb[0].mxu0
      %v470 = vadd.f32 %v398, %v469
      %471 = vdwg.mxu0
      %v472 = vmax.f32 %v468, 0.0
      %v473 = vmax.f32 %v470, 0.0
      %v474 = vld [vmem:[%s3] sm:$0xff]
      %v475 = vld [vmem:[%s3 + $0x8] sm:$0xff]
      %v476 = vld [vmem:[%s3 + $0x10] sm:$0xff]
      %v477 = vld [vmem:[%s3 + $0x18] sm:$0xff]
      %v478 = vld [vmem:[%s3 + $0x20] sm:$0xff]
      %v479 = vld [vmem:[%s3 + $0x28] sm:$0xff]
      %v480 = vld [vmem:[%s3 + $0x30] sm:$0xff]
      %v481 = vld [vmem:[%s3 + $0x38] sm:$0xff]
      %v482 = vld [vmem:[%s3 + $0x40] sm:$0xff]
      %v483 = vld [vmem:[%s3 + $0x48] sm:$0xff]
      %v484 = vld [vmem:[%s3 + $0x50] sm:$0xff]
      %v485 = vld [vmem:[%s3 + $0x58] sm:$0xff]
      %v486 = vld [vmem:[%s3 + $0x60] sm:$0xff]
      %v487 = vld [vmem:[%s3 + $0x68] sm:$0xff]
      %v488 = vld [vmem:[%s3 + $0x70] sm:$0xff]
      %v489 = vld [vmem:[%s3 + $0x78] sm:$0xff]
      %v490 = vld [vmem:[%s4] sm:$0x1]
      %v492 = vlaneseq
      %v493 = vshrl.u32 %v492, 7
      %v494 = vsub.s32 0, %v493
      %v495 = vrot.slane %v490, %v494
      %497 = vmatprep.subr.mxu0 0.0
      %498 = vmatpush1.msra.mxu0 %v474
      %499 = vmatprep.subr.mxu0 0.0
      %500 = vmatpush1.msra.mxu0 %v475
      %501 = vmatprep.subr.mxu0 0.0
      %502 = vmatpush1.msra.mxu0 %v476
      %503 = vmatprep.subr.mxu0 0.0
      %504 = vmatpush1.msra.mxu0 %v477
      %505 = vmatprep.subr.mxu0 0.0
      %506 = vmatpush1.msra.mxu0 %v478
      %507 = vmatprep.subr.mxu0 0.0
      %508 = vmatpush1.msra.mxu0 %v479
      %509 = vmatprep.subr.mxu0 0.0
      %510 = vmatpush1.msra.mxu0 %v480
      %511 = vmatprep.subr.mxu0 0.0
      %512 = vmatpush1.msra.mxu0 %v481
      %513 = vmatprep.subr.mxu0 0.0
      %514 = vmatpush1.msra.mxu0 %v482
      %515 = vmatprep.subr.mxu0 0.0
      %516 = vmatpush1.msra.mxu0 %v483
      %517 = vmatprep.subr.mxu0 0.0
      %518 = vmatpush1.msra.mxu0 %v484
      %519 = vmatprep.subr.mxu0 0.0
      %520 = vmatpush1.msra.mxu0 %v485
      %521 = vmatprep.subr.mxu0 0.0
      %522 = vmatpush1.msra.mxu0 %v486
      %523 = vmatprep.subr.mxu0 0.0
      %524 = vmatpush1.msra.mxu0 %v487
      %525 = vmatprep.subr.mxu0 0.0
      %526 = vmatpush1.msra.mxu0 %v488
      %527 = vmatprep.subr.mxu0 0.0
      %528 = vmatpush1.msra.mxu0 %v489
      %529 = vmatprep.subr.mxu0 0.0
      %530 = vmatpush1.msra.mxu0 0.0
      %531 = vmatprep.subr.mxu0 0.0
      %532 = vmatpush1.msra.mxu0 0.0
      %533 = vmatprep.subr.mxu0 0.0
      %534 = vmatpush1.msra.mxu0 0.0
      %535 = vmatprep.subr.mxu0 0.0
      %536 = vmatpush1.msra.mxu0 0.0
      %537 = vmatprep.subr.mxu0 0.0
      %538 = vmatpush1.msra.mxu0 0.0
      %539 = vmatprep.subr.mxu0 0.0
      %540 = vmatpush1.msra.mxu0 0.0
      %541 = vmatprep.subr.mxu0 0.0
      %542 = vmatpush1.msra.mxu0 0.0
      %543 = vmatprep.subr.mxu0 0.0
      %544 = vmatpush1.msra.mxu0 0.0
      %545 = vmatprep.subr.mxu0 0.0
      %546 = vmatpush1.msra.mxu0 0.0
      %547 = vmatprep.subr.mxu0 0.0
      %548 = vmatpush1.msra.mxu0 0.0
      %549 = vmatprep.subr.mxu0 0.0
      %550 = vmatpush1.msra.mxu0 0.0
      %551 = vmatprep.subr.mxu0 0.0
      %552 = vmatpush1.msra.mxu0 0.0
      %553 = vmatprep.subr.mxu0 0.0
      %554 = vmatpush1.msra.mxu0 0.0
      %555 = vmatprep.subr.mxu0 0.0
      %556 = vmatpush1.msra.mxu0 0.0
      %557 = vmatprep.subr.mxu0 0.0
      %558 = vmatpush1.msra.mxu0 0.0
      %559 = vmatprep.subr.mxu0 0.0
      %560 = vmatpush1.msra.mxu0 0.0
      %561 = vmatprep.mubr.f32.mxu0 0.0
      %562 = vmatmul.mubr.f32.gmra.mrb[0].mxu0 %v472
      %v563 = vpop.f32.mrb[0].mxu0
      %v564 = vadd.f32 %v495, %v563
      %v565 = vpop.f32.mrb[0].mxu0
      %566 = vdwg.mxu0
      %v567 = vld [vmem:[%s5] sm:$0xff]
      %v568 = vld [vmem:[%s5 + $0x8] sm:$0xff]
      %v569 = vld [vmem:[%s5 + $0x10] sm:$0xff]
      %v570 = vld [vmem:[%s5 + $0x18] sm:$0xff]
      %v571 = vld [vmem:[%s5 + $0x20] sm:$0xff]
      %v572 = vld [vmem:[%s5 + $0x28] sm:$0xff]
      %v573 = vld [vmem:[%s5 + $0x30] sm:$0xff]
      %v574 = vld [vmem:[%s5 + $0x38] sm:$0xff]
      %v575 = vld [vmem:[%s5 + $0x40] sm:$0xff]
      %v576 = vld [vmem:[%s5 + $0x48] sm:$0xff]
      %v577 = vld [vmem:[%s5 + $0x50] sm:$0xff]
      %v578 = vld [vmem:[%s5 + $0x58] sm:$0xff]
      %v579 = vld [vmem:[%s5 + $0x60] sm:$0xff]
      %v580 = vld [vmem:[%s5 + $0x68] sm:$0xff]
      %v581 = vld [vmem:[%s5 + $0x70] sm:$0xff]
      %v582 = vld [vmem:[%s5 + $0x78] sm:$0xff]
      %v583 = vld [vmem:[%s6] sm:$0x1]
      %v585 = vlaneseq
      %v586 = vshrl.u32 %v585, 7
      %v587 = vsub.s32 0, %v586
      %v588 = vrot.slane %v583, %v587
      %590 = vmatprep.subr.mxu0 0.0
      %591 = vmatpush1.msra.mxu0 %v567
      %592 = vmatprep.subr.mxu0 0.0
      %593 = vmatpush1.msra.mxu0 %v568
      %594 = vmatprep.subr.mxu0 0.0
      %595 = vmatpush1.msra.mxu0 %v569
      %596 = vmatprep.subr.mxu0 0.0
      %597 = vmatpush1.msra.mxu0 %v570
      %598 = vmatprep.subr.mxu0 0.0
      %599 = vmatpush1.msra.mxu0 %v571
      %600 = vmatprep.subr.mxu0 0.0
      %601 = vmatpush1.msra.mxu0 %v572
      %602 = vmatprep.subr.mxu0 0.0
      %603 = vmatpush1.msra.mxu0 %v573
      %604 = vmatprep.subr.mxu0 0.0
      %605 = vmatpush1.msra.mxu0 %v574
      %606 = vmatprep.subr.mxu0 0.0
      %607 = vmatpush1.msra.mxu0 %v575
      %608 = vmatprep.subr.mxu0 0.0
      %609 = vmatpush1.msra.mxu0 %v576
      %610 = vmatprep.subr.mxu0 0.0
      %611 = vmatpush1.msra.mxu0 %v577
      %612 = vmatprep.subr.mxu0 0.0
      %613 = vmatpush1.msra.mxu0 %v578
      %614 = vmatprep.subr.mxu0 0.0
      %615 = vmatpush1.msra.mxu0 %v579
      %616 = vmatprep.subr.mxu0 0.0
      %617 = vmatpush1.msra.mxu0 %v580
      %618 = vmatprep.subr.mxu0 0.0
      %619 = vmatpush1.msra.mxu0 %v581
      %620 = vmatprep.subr.mxu0 0.0
      %621 = vmatpush1.msra.mxu0 %v582
      %622 = vmatprep.subr.mxu0 0.0
      %623 = vmatpush1.msra.mxu0 0.0
      %624 = vmatprep.subr.mxu0 0.0
      %625 = vmatpush1.msra.mxu0 0.0
      %626 = vmatprep.subr.mxu0 0.0
      %627 = vmatpush1.msra.mxu0 0.0
      %628 = vmatprep.subr.mxu0 0.0
      %629 = vmatpush1.msra.mxu0 0.0
      %630 = vmatprep.subr.mxu0 0.0
      %631 = vmatpush1.msra.mxu0 0.0
      %632 = vmatprep.subr.mxu0 0.0
      %633 = vmatpush1.msra.mxu0 0.0
      %634 = vmatprep.subr.mxu0 0.0
      %635 = vmatpush1.msra.mxu0 0.0
      %636 = vmatprep.subr.mxu0 0.0
      %637 = vmatpush1.msra.mxu0 0.0
      %638 = vmatprep.subr.mxu0 0.0
      %639 = vmatpush1.msra.mxu0 0.0
      %640 = vmatprep.subr.mxu0 0.0
      %641 = vmatpush1.msra.mxu0 0.0
      %642 = vmatprep.subr.mxu0 0.0
      %643 = vmatpush1.msra.mxu0 0.0
      %644 = vmatprep.subr.mxu0 0.0
      %645 = vmatpush1.msra.mxu0 0.0
      %646 = vmatprep.subr.mxu0 0.0
      %647 = vmatpush1.msra.mxu0 0.0
      %648 = vmatprep.subr.mxu0 0.0
      %649 = vmatpush1.msra.mxu0 0.0
      %650 = vmatprep.subr.mxu0 0.0
      %651 = vmatpush1.msra.mxu0 0.0
      %652 = vmatprep.subr.mxu0 0.0
      %653 = vmatpush1.msra.mxu0 0.0
      %654 = vmatprep.mubr.f32.mxu0 0.0
      %655 = vmatmul.mubr.f32.gmra.mrb[0].mxu0 %v473
      %v656 = vpop.f32.mrb[0].mxu0
      %v657 = vadd.f32 %v588, %v656
      %v658 = vpop.f32.mrb[0].mxu0
      %659 = vdwg.mxu0
      %v660 = vxor.u32 %v657, 2147483648
      %v661 = vmul.f32 %v660, 1.442695
      %v662 = vpow.pop %v661
      %v663 = vadd.f32 %v662, 1.0
      %v664 = vrcp.pop %v663
      %v665 = vmul.f32 1.0, %v664
      %s666 = sld [smem:[#allocation2]]
      %v667 = vmul.f32 %v564, %v665
      %v668 = vsub.f32 1.0, %v665
      %v669 = vmul.f32 %v356, %v668
      %v670 = vstv %s666
      %v671 = vmul.f32 %v669, %v670
      %v672 = vadd.f32 %v667, %v671
      %673 = vadd.xlane.f32.xlu0 %v672
      %v674 = vpop.xlane.xlu0 %673
      %v675 = vmul.f32 %v674, 0.03125
      %v676 = vsub.f32 %v672, %v675
      %v677 = vmul.f32 %v676, %v676
      %678 = vadd.xlane.f32.xlu0 %v677
      %v679 = vpop.xlane.xlu0 %678
      %v680 = vmul.f32 %v675, %v675
      %v681 = vmul.f32 %v680, 96.0
      %v682 = vsub.f32 %v679, %v681
      %v683 = vmul.f32 %v682, 0.03125
      %v684 = vadd.f32 %v683, 1e-05
      %v685 = vrsqrt.pop %v684
      %v686 = vmul.f32 %v676, %v685
      %v687 = vld [vmem:[%s7] sm:$0x1]
      %v689 = vlaneseq
      %v690 = vshrl.u32 %v689, 7
      %v691 = vsub.s32 0, %v690
      %v692 = vrot.slane %v687, %v691
      %v694 = vmul.f32 %v686, %v692
      %v695 = vld [vmem:[%s8] sm:$0x1]
      %v697 = vlaneseq
      %v698 = vshrl.u32 %v697, 7
      %v699 = vsub.s32 0, %v698
      %v700 = vrot.slane %v695, %v699
      %v702 = vadd.f32 %v694, %v700
      %703 = vst [vmem:[%s355] sm:$0xff] %v702
      %p704 = scmp.lt.s32.totalorder %s22, 1
      %s705 = scalar_select %p704, %s22, 1
      %s706 = smul.addr %s705, 8
      %s707 = scalar_lea.vmem %s10, %s706
      // Predicated region
      $region61: #{incremental_residual_block.1} parent=59 // pred_check
        %p708 = pneg %p255
      $region62: #{incremental_residual_block.1} parent=59 // pred_check_branch
        %710 = sbr.rel (%p708) target = $region64
      $region63: #{incremental_residual_block.1} parent=59 // pred_region
        _
      $region64: #{incremental_residual_block.1} parent=59 // pred_fallthru
        _
    $region60: #{incremental_residual_block.1} parent=5 // pred_fallthru
      _
    %p711 = scmp.le.s32.totalorder 2, %s17
    // Predicated region
    $region65: #{incremental_residual_block.1} parent=5 // pred_check
      %p712 = pneg %p711
    $region66: #{incremental_residual_block.1} parent=5 // pred_check_branch
      %714 = sbr.rel (%p712) target = $region68
    $region67: #{incremental_residual_block.1} parent=5 // pred_region
      %s715 = ssub.s32 %s17, 2
      // Predicated region
      $region69: #{incremental_residual_block.1} parent=67 // pred_check
        %p716 = pneg %p261
      $region70: #{incremental_residual_block.1} parent=67 // pred_check_branch
        %718 = sbr.rel (%p716) target = $region72
      $region71: #{incremental_residual_block.1} parent=67 // pred_region
        %p719 = scmp.lt.s32.totalorder %s23, 1
        %s720 = scalar_select %p719, %s23, 1
        %s721 = smul.addr %s720, 8
        %s722 = scalar_lea.vmem %s10, %s721
      $region72: #{incremental_residual_block.1} parent=67 // pred_fallthru
        _
    $region68: #{incremental_residual_block.1} parent=5 // pred_fallthru
      _
  $region6: #{incremental_residual_block.1} parent=0 // loop_footer
    %s21 = sadd.s32 1, %s17
  $region7: #{incremental_residual_block.1} parent=0 // loop_footer_branch
    %16 = sbr.rel target = $region3
  $region8: #{incremental_residual_block.1} parent=0 // loop_exit
    _

</llo_original>
